<compile_context>
chip_gen: v7x
topology: tpu7x:2x2x1
jax: 0.10.0
libtpu: 0.0.40
codegen_flags: <defaults>
</compile_context>

<pallas_src>
import jax
import jax.numpy as jnp
from jax.experimental import pallas as pl
from jax.experimental.pallas import tpu as pltpu


def _sum_diff_kernel(x_ref, sum_ref, diff_ref):
    # x_ref: (b_tile, 2, tt) VMEM block; outputs: dense (b_tile, tt) blocks.
    left = x_ref[:, 0, :]
    right = x_ref[:, 1, :]
    sum_ref[...] = left + right
    diff_ref[...] = left - right


def sum_and_difference(x, *, t_tile=None, vmem_budget_bytes=24 * 1024 * 1024):
    """Pallas equivalent of SumAndDifference.forward.

    Args:
        x: (B, 2, T) stereo signal.
    Returns:
        (sum_sig, diff_sig): each of shape (B, 1, T), same dtype as x.
    """
    if x.shape[1] != 2:
        raise ValueError(f"Input must be stereo: {x.shape[1]} channel(s).")
    B, _, T = x.shape
    itemsize = jnp.dtype(x.dtype).itemsize

    # Native sublane packing: 8 rows for 32-bit, 16 for bf16, 32 for int8/fp8.
    pack = max(8, 32 // itemsize)
    b_tile = min(B, pack)

    # Double-buffered VMEM bytes contributed per unit of t_tile:
    #   input block : b_tile rows, channel dim (2) padded up to `pack` sublanes
    #   outputs     : two dense (b_tile, tt) blocks
    per_t = 2 * b_tile * (pack * itemsize + 2 * itemsize)
    if t_tile is None:
        t_tile = min(65536, vmem_budget_bytes // per_t)
    # Time tile must be lane-aligned (multiple of 128) unless it covers all of T.
    t_tile = max(128, (t_tile // 128) * 128)
    tt = T if T <= t_tile else t_tile

    grid = (pl.cdiv(B, b_tile), pl.cdiv(T, tt))

    in_spec = pl.BlockSpec((b_tile, 2, tt), lambda i, j: (i, 0, j))
    out_spec = pl.BlockSpec((b_tile, tt), lambda i, j: (i, j))
    out_shape = (
        jax.ShapeDtypeStruct((B, T), x.dtype),
        jax.ShapeDtypeStruct((B, T), x.dtype),
    )

    sum2d, diff2d = pl.pallas_call(
        _sum_diff_kernel,
        out_shape=out_shape,
        grid_spec=pltpu.PrefetchScalarGridSpec(
            num_scalar_prefetch=0,
            grid=grid,
            in_specs=[in_spec],
            out_specs=[out_spec, out_spec],
        ),
        compiler_params=pltpu.CompilerParams(
            dimension_semantics=("parallel", "parallel"),
            # Footprint stays <= ~24 MiB by construction; 32 MiB scoped limit is
            # safe on every generation (v7x physical VMEM is 64 MiB).
            vmem_limit_bytes=32 * 1024 * 1024,
        ),
        cost_estimate=pl.CostEstimate(
            flops=2 * B * T,
            transcendentals=0,
            bytes_accessed=4 * B * T * itemsize,
        ),
    )(x)

    # Re-insert the channel axis (free reshape in XLA) to match PyTorch output.
    return sum2d[:, None, :], diff2d[:, None, :]


if __name__ == "__main__":
    key = jax.random.PRNGKey(0)
    B, C, T = 2, 2, 1024  # small stereo signal
    x = jax.random.normal(key, (B, C, T), dtype=jnp.float32)

    sum_sig, diff_sig = sum_and_difference(x)
    jax.block_until_ready((sum_sig, diff_sig))

    # reference check against plain JAX
    ref_sum = (x[:, 0, :] + x[:, 1, :])[:, None, :]
    ref_diff = (x[:, 0, :] - x[:, 1, :])[:, None, :]
    assert sum_sig.shape == (B, 1, T) and diff_sig.shape == (B, 1, T)
    assert jnp.allclose(sum_sig, ref_sum)
    assert jnp.allclose(diff_sig, ref_diff)

    # non-128-aligned T (single full-extent block)
    x2 = jax.random.normal(jax.random.PRNGKey(1), (3, 2, 300), dtype=jnp.float32)
    s2, d2 = sum_and_difference(x2)
    jax.block_until_ready((s2, d2))
    assert s2.shape == (3, 1, 300) and d2.shape == (3, 1, 300)
    assert jnp.allclose(s2[:, 0, :], x2[:, 0, :] + x2[:, 1, :])
    assert jnp.allclose(d2[:, 0, :], x2[:, 0, :] - x2[:, 1, :])

    # bf16 path exercises the dtype-aware sublane packing
    x3 = jax.random.normal(jax.random.PRNGKey(2), (2, 2, 640)).astype(jnp.bfloat16)
    s3, d3 = sum_and_difference(x3)
    jax.block_until_ready((s3, d3))
    assert jnp.allclose(s3[:, 0, :].astype(jnp.float32),
                        (x3[:, 0, :] + x3[:, 1, :]).astype(jnp.float32))
    assert jnp.allclose(d3[:, 0, :].astype(jnp.float32),
                        (x3[:, 0, :] - x3[:, 1, :]).astype(jnp.float32))

    # multi-block grid with ragged edges along both batch and time axes
    x4 = jax.random.normal(jax.random.PRNGKey(3), (10, 2, 700), dtype=jnp.float32)
    s4, d4 = sum_and_difference(x4, t_tile=256)
    jax.block_until_ready((s4, d4))
    assert s4.shape == (10, 1, 700) and d4.shape == (10, 1, 700)
    assert jnp.allclose(s4[:, 0, :], x4[:, 0, :] + x4[:, 1, :])
    assert jnp.allclose(d4[:, 0, :], x4[:, 0, :] - x4[:, 1, :])

    print("KERNEL_OK")
</pallas_src>

<mosaic_0001>
module attributes {stable_mosaic.version = 11 : i64} {
  func.func @_sum_diff_kernel(%arg0: i32, %arg1: i32, %arg2: memref<2x2x1024xf32, #tpu.memory_space<vmem>>, %arg3: memref<2x1024xf32, #tpu.memory_space<vmem>>, %arg4: memref<2x1024xf32, #tpu.memory_space<vmem>>) attributes {dimension_semantics = [#tpu.dimension_semantics<parallel>, #tpu.dimension_semantics<parallel>], iteration_bounds = array<i64: 1, 1>, scalar_prefetch = 0 : i64, scratch_operands = 0 : i64, tpu.core_type = #tpu.core_type<tc>, window_params = [{transform_indices = @transform_0, window_bounds = array<i64: 2, 2, 1024>}, {transform_indices = @transform_1, window_bounds = array<i64: 2, 1024>}, {transform_indices = @transform_2, window_bounds = array<i64: 2, 1024>}]} {
    %c0 = arith.constant 0 : index
    %c0_0 = arith.constant 0 : index
    %c0_1 = arith.constant 0 : index
    %0 = vector.load %arg2[%c0, %c0_0, %c0_1] : memref<2x2x1024xf32, #tpu.memory_space<vmem>>, vector<2x1x1024xf32>
    %1 = vector.shape_cast %0 : vector<2x1x1024xf32> to vector<2x1024xf32>
    %c0_2 = arith.constant 0 : index
    %c1 = arith.constant 1 : index
    %c0_3 = arith.constant 0 : index
    %2 = vector.load %arg2[%c0_2, %c1, %c0_3] : memref<2x2x1024xf32, #tpu.memory_space<vmem>>, vector<2x1x1024xf32>
    %3 = vector.shape_cast %2 : vector<2x1x1024xf32> to vector<2x1024xf32>
    %4 = arith.addf %1, %3 : vector<2x1024xf32>
    %c0_4 = arith.constant 0 : index
    %c0_5 = arith.constant 0 : index
    %5 = vector.load %arg3[%c0_4, %c0_5] : memref<2x1024xf32, #tpu.memory_space<vmem>>, vector<2x1024xf32>
    tpu.vector_store %arg3[%c0_4, %c0_5], %4 {strides = array<i32>} : memref<2x1024xf32, #tpu.memory_space<vmem>>, vector<2x1024xf32>,
    %6 = arith.subf %1, %3 : vector<2x1024xf32>
    %c0_6 = arith.constant 0 : index
    %c0_7 = arith.constant 0 : index
    %7 = vector.load %arg4[%c0_6, %c0_7] : memref<2x1024xf32, #tpu.memory_space<vmem>>, vector<2x1024xf32>
    tpu.vector_store %arg4[%c0_6, %c0_7], %6 {strides = array<i32>} : memref<2x1024xf32, #tpu.memory_space<vmem>>, vector<2x1024xf32>,
    return
  }
  func.func @transform_0(%arg0: i32, %arg1: i32) -> (i32, i32, i32) {
    %c0_i32 = arith.constant 0 : i32
    %c0_i32_0 = arith.constant 0 : i32
    return %arg0, %c0_i32, %arg1 : i32, i32, i32
  }
  func.func @transform_1(%arg0: i32, %arg1: i32) -> (i32, i32) {
    %c0_i32 = arith.constant 0 : i32
    return %arg0, %arg1 : i32, i32
  }
  func.func @transform_2(%arg0: i32, %arg1: i32) -> (i32, i32) {
    %c0_i32 = arith.constant 0 : i32
    return %arg0, %arg1 : i32, i32
  }
}

</mosaic_0001>

<llo_original>
// kernel: tpu_custom_call.1
$region0: #{tpu_custom_call.1}
  #allocation0 [shape = 'u32[]', space=smem, size = 0x4, offset = 0x4, fixed_abs, tag = 'smem constant byte address 0x4 - core index']
  #allocation1 [shape = 'u32[144,128]{1,0:T(1,128)}', space=vmem, size = 0x12000, scoped, tag = 'internal scratch']
  %s0 = inlined_call_operand.hbm [shape: f32[2,2,1024], index: 0, kind: input, shape index: {}]
  %s1 = inlined_call_operand.hbm [shape: f32[2,1024], index: 1, kind: output, shape index: {0}]
  %s2 = inlined_call_operand.hbm [shape: f32[2,1024], index: 2, kind: output, shape index: {1}]
  %3 = xla_tuple %s1, %s2
  %s4 = sld [smem:[#allocation0]]
  $region26: #{tpu_custom_call.1} parent=0
    _
  %s6 = ssub.s32 1, %s4
  %s7 = scalar_select 0, %s6, %s4
  $region1: #{tpu_custom_call.1} parent=0
    #allocation2 [shape = 'u8[16384]{0}', space=vmem, size = 0x4000, scoped, tag = 'input window, operand 0, single buffered']
    #allocation3 [shape = 's32[1]{0}', space=sflag, size = 0x4, scoped, tag = 'scoped memory for tpu_custom_call.1']
    #allocation4 [shape = 's32[1]{0}', space=sflag, size = 0x4, scoped, tag = 'scoped memory for tpu_custom_call.1']
    #allocation5 [shape = 'u8[8192]{0}', space=vmem, size = 0x2000, scoped, tag = 'output window, operand 0, single buffered']
    #allocation6 [shape = 'u8[8192]{0}', space=vmem, size = 0x2000, scoped, tag = 'output window, operand 1, single buffered']
    #allocation7 [shape = 's32[1]{0}', space=sflag, size = 0x4, scoped, tag = 'scoped memory for tpu_custom_call.1']
    %8 = vsyncpa [#allocation3], 0
    %9 = vsyncpa [#allocation4], 0
    %10 = vsyncpa [#allocation7], 0
    // Predicated region
    $region2: #{tpu_custom_call.1} parent=1 // pred_check
      _
    $region3: #{tpu_custom_call.1} parent=1 // pred_check_branch
      %12 = sbr.rel (0) target = $region5
    $region4: #{tpu_custom_call.1} parent=1 // pred_region
      %s14 = ssub.s32 512, 512
      %15 = vsyncadd [#allocation3], %s14
      %s16 = sshll.u32 [#allocation2], 4
      %s17 = int_to_ptr.vmem [resolvable:$true] %s16
      %22 = dma.hbm_to_vmem [thread:$0]  %s0, 512, %s17, [#allocation3], 256, 256, 16
    $region5: #{tpu_custom_call.1} parent=1 // pred_fallthru
      _
    // Predicated region
    $region6: #{tpu_custom_call.1} parent=1 // pred_check
      _
    $region7: #{tpu_custom_call.1} parent=1 // pred_check_branch
      %24 = sbr.rel (0) target = $region9
    $region8: #{tpu_custom_call.1} parent=1 // pred_region
      %25 = dma.done [#allocation3], 512
    $region9: #{tpu_custom_call.1} parent=1 // pred_fallthru
      _
    %v26 = vld [vmem:[#allocation2] ss:$2 sm:$0xff]
    %s27 = scalar_lea.vmem [#allocation2], 16
    %v28 = vld [vmem:[%s27] ss:$2 sm:$0xff]
    %s29 = scalar_lea.vmem [#allocation2], 1
    %v30 = vld [vmem:[%s29] ss:$2 sm:$0xff]
    %s31 = scalar_lea.vmem [#allocation2], 17
    %v32 = vld [vmem:[%s31] ss:$2 sm:$0xff]
    %v33 = vadd.f32 %v26, %v30
    %v34 = vadd.f32 %v28, %v32
    %v37 = vcombine.low %v33, %v34
    %v38 = vcombine.high %v33, %v34
    %v40 = vunpack.c.l.s4 1935823168
    %v41 = vunpack.c.0.s8 %v40
    %v42 = vlaneseq
    %v43 = vshrl.u32 %v42, 7
    %v44 = vsub.s32 %v41, %v43
    %v45 = vrot.slane %v37, %v44
    %v47 = vunpack.c.l.s4 1935823168
    %v48 = vunpack.c.0.s8 %v47
    %v49 = vlaneseq
    %v50 = vshrl.u32 %v49, 7
    %v51 = vsub.s32 %v48, %v50
    %v52 = vrot.slane %v38, %v51
    %55 = vst [vmem:[#allocation5] sm:$0xff] %v45
    %56 = vst [vmem:[#allocation5 + $0x8] sm:$0xff] %v52
    %v57 = vsub.f32 %v26, %v30
    %v58 = vsub.f32 %v28, %v32
    %v61 = vcombine.low %v57, %v58
    %v62 = vcombine.high %v57, %v58
    %v64 = vunpack.c.l.s4 1935823168
    %v65 = vunpack.c.0.s8 %v64
    %v66 = vlaneseq
    %v67 = vshrl.u32 %v66, 7
    %v68 = vsub.s32 %v65, %v67
    %v69 = vrot.slane %v61, %v68
    %v71 = vunpack.c.l.s4 1935823168
    %v72 = vunpack.c.0.s8 %v71
    %v73 = vlaneseq
    %v74 = vshrl.u32 %v73, 7
    %v75 = vsub.s32 %v72, %v74
    %v76 = vrot.slane %v62, %v75
    %79 = vst [vmem:[#allocation6] sm:$0xff] %v69
    %80 = vst [vmem:[#allocation6 + $0x8] sm:$0xff] %v76
    // Predicated region
    $region10: #{tpu_custom_call.1} parent=1 // pred_check
      _
    $region11: #{tpu_custom_call.1} parent=1 // pred_check_branch
      %82 = sbr.rel (0) target = $region13
    $region12: #{tpu_custom_call.1} parent=1 // pred_region
      %s84 = ssub.s32 256, 256
      %85 = vsyncadd [#allocation4], %s84
      %s87 = sshll.u32 [#allocation5], 4
      %s88 = int_to_ptr.vmem [resolvable:$true] %s87
      %90 = dma.vmem_to_hbm [thread:$0]  %s88, 256, %s1, [#allocation4]
    $region13: #{tpu_custom_call.1} parent=1 // pred_fallthru
      _
    // Predicated region
    $region14: #{tpu_custom_call.1} parent=1 // pred_check
      _
    $region15: #{tpu_custom_call.1} parent=1 // pred_check_branch
      %92 = sbr.rel (0) target = $region17
    $region16: #{tpu_custom_call.1} parent=1 // pred_region
      %s94 = ssub.s32 256, 256
      %95 = vsyncadd [#allocation7], %s94
      %s97 = sshll.u32 [#allocation6], 4
      %s98 = int_to_ptr.vmem [resolvable:$true] %s97
      %100 = dma.vmem_to_hbm [thread:$0]  %s98, 256, %s2, [#allocation7]
    $region17: #{tpu_custom_call.1} parent=1 // pred_fallthru
      _
    // Predicated region
    $region18: #{tpu_custom_call.1} parent=1 // pred_check
      _
    $region19: #{tpu_custom_call.1} parent=1 // pred_check_branch
      %102 = sbr.rel (0) target = $region21
    $region20: #{tpu_custom_call.1} parent=1 // pred_region
      %103 = dma.done [#allocation4], 256
    $region21: #{tpu_custom_call.1} parent=1 // pred_fallthru
      _
    // Predicated region
    $region22: #{tpu_custom_call.1} parent=1 // pred_check
      _
    $region23: #{tpu_custom_call.1} parent=1 // pred_check_branch
      %105 = sbr.rel (0) target = $region25
    $region24: #{tpu_custom_call.1} parent=1 // pred_region
      %106 = dma.done [#allocation7], 256
    $region25: #{tpu_custom_call.1} parent=1 // pred_fallthru
      _
    %107 = vsyncpa [#allocation3], 1
    %108 = vsyncpa [#allocation4], 1
    %109 = vsyncpa [#allocation7], 1

</llo_original>
